<compile_context>
chip_gen: v7x
topology: tpu7x:2x2x1
jax: 0.10.0
libtpu: 0.0.40
codegen_flags: <defaults>
</compile_context>

<pallas_src>
import functools
import math

import jax
import jax.numpy as jnp
from jax.experimental import pallas as pl
from jax.experimental.pallas import tpu as pltpu


def _pick_tile(dim, candidates):
    """Largest candidate that evenly divides `dim`, else the full dim (always legal)."""
    for c in candidates:
        if dim % c == 0:
            return c
    return dim


def _pick_bn(N, W, E, vmem_budget_bytes=16 * 1024 * 1024):
    """Group tile for Kernel B.

    Constraints: bn divides N; block dims legal (bn % 8 == 0 and bn*E % 128 == 0,
    or bn == N == full extent); prefer >= 2 grid steps so both v7x TensorCores get
    work; cap by a VMEM budget for the double-buffered qkv/out blocks.
    """
    per_group = W * (3 * E * 2 * 2 + E * 4 * 2)  # bf16 qkv x2 bufs + f32 out x2 bufs
    cap = max(1, vmem_budget_bytes // max(per_group, 1))
    for bn in range(min(N, cap), 0, -1):
        if N % bn:
            continue
        if bn % 8 or (bn * E) % 128:
            continue
        if N // bn >= 2:
            return bn
    return N  # full extent: always a legal block shape


def _vmem_limit_bytes(default=64 * 1024 * 1024):
    """Scoped VMEM limit: large on v5e/v6e (128 MiB phys), conservative on v7x (64 MiB)."""
    try:
        cap = pltpu.get_tpu_info().vmem_capacity_bytes
    except Exception:
        return default
    return int(min(default, cap * 3 // 4))


# --------------------------- Kernel A: embed + packed QKV ---------------------------
def _embed_qkv_kernel(x_ref, wemb_ref, bemb_ref, wqkv_ref, bqkv_ref, qkv_ref, acc_ref):
    # grid = (row tiles, num_items reduction tiles); reduction axis is last.
    k = pl.program_id(1)

    @pl.when(k == 0)
    def _():
        acc_ref[...] = jnp.zeros_like(acc_ref)

    # x block (bm, bk) @ Wemb^T block (bk, E), f32 accumulation on the MXU.
    acc_ref[...] += jnp.dot(x_ref[...], wemb_ref[...],
                            preferred_element_type=jnp.float32)

    @pl.when(k == pl.num_programs(1) - 1)
    def _():
        emb = (acc_ref[...] + bemb_ref[...]).astype(wqkv_ref.dtype)
        qkv = jnp.dot(emb, wqkv_ref[...],
                      preferred_element_type=jnp.float32) + bqkv_ref[...]
        qkv_ref[...] = qkv.astype(qkv_ref.dtype)


# ------------------- Kernel B: batched attention + out projection -------------------
def _attn_outproj_kernel(qkv_ref, wout_ref, bout_ref, out_ref, *,
                         num_heads, head_dim, embed_dim, window,
                         groups_per_block, scale):
    H, Dh, E, W, bn = num_heads, head_dim, embed_dim, window, groups_per_block
    G = bn * H  # batched (group, head) dimension

    qkv = qkv_ref[...]  # (W, bn, 3E) bf16
    # E-aligned slices only; heads handled via free row-major reshape (bn, E)->(bn*H, Dh).
    q = jnp.transpose(qkv[:, :, :E].reshape(W, G, Dh), (1, 0, 2))          # (G, W, Dh)
    k = jnp.transpose(qkv[:, :, E:2 * E].reshape(W, G, Dh), (1, 0, 2))     # (G, W, Dh)
    v = jnp.transpose(qkv[:, :, 2 * E:].reshape(W, G, Dh), (1, 0, 2))      # (G, W, Dh)

    # Scores for ALL groups/heads at once; 1/sqrt(Dh) applied to the f32 scores.
    s = jnp.einsum("gqd,gkd->gqk", q, k,
                   preferred_element_type=jnp.float32) * scale             # (G, W, W)
    s = s - jnp.max(s, axis=-1, keepdims=True)
    p = jnp.exp(s)
    p = p * pl.reciprocal(jnp.sum(p, axis=-1, keepdims=True), approx=True)

    # Batched P @ V (flash-style bf16 P on the MXU, f32 accumulation).
    ctx = jnp.einsum("gqk,gkd->gqd", p.astype(v.dtype), v,
                     preferred_element_type=jnp.float32)                   # (G, W, Dh)

    # (G, W, Dh) -> (W, bn, E) row-major -> ONE (W*bn, E) out-projection + single bias add.
    ctx = jnp.transpose(ctx, (1, 0, 2)).reshape(W * bn, E).astype(wout_ref.dtype)
    out = jnp.dot(ctx, wout_ref[...],
                  preferred_element_type=jnp.float32) + bout_ref[...]      # (W*bn, E)

    # Lane-dense store: (W, bn*E) block of the (W, N*E) output slab.
    out_ref[...] = out.reshape(W, bn * E).astype(out_ref.dtype)


def user_attention_forward(x, params, *, window_size, num_heads,
                           compute_dtype=jnp.bfloat16):
    B, num_items = x.shape
    E = params["w_emb_t"].shape[1]
    W = window_size
    N = B // W
    H = num_heads
    Dh = E // H

    vmem_limit = _vmem_limit_bytes()

    # bf16 MXU inputs (halves HBM weight streaming); biases/accumulation stay f32.
    xc = x.astype(compute_dtype)
    wemb = params["w_emb_t"].astype(compute_dtype)
    wqkv = params["w_qkv_t"].astype(compute_dtype)
    wout = params["w_out_t"].astype(compute_dtype)
    bemb = params["b_emb"].astype(jnp.float32)
    bqkv = params["b_qkv"].astype(jnp.float32)
    bout = params["b_out"].astype(jnp.float32)

    # ---------------- Kernel A: embedding + packed QKV projection ----------------
    bm = _pick_tile(B, (1024, 512, 256, 128, 64, 32, 16, 8))      # row tile (parallel)
    bk = _pick_tile(num_items, (2048, 1024, 512, 256, 128))       # reduction tile
    grid_a = (B // bm, num_items // bk)

    qkv = pl.pallas_call(
        _embed_qkv_kernel,
        out_shape=jax.ShapeDtypeStruct((B, 3 * E), compute_dtype),
        grid_spec=pltpu.PrefetchScalarGridSpec(
            num_scalar_prefetch=0,
            grid=grid_a,
            in_specs=[
                pl.BlockSpec((bm, bk), lambda i, k: (i, k)),        # x
                pl.BlockSpec((bk, E), lambda i, k: (k, 0)),         # Wemb^T
                pl.BlockSpec((1, E), lambda i, k: (0, 0)),          # b_emb
                pl.BlockSpec((E, 3 * E), lambda i, k: (0, 0)),      # Wqkv^T
                pl.BlockSpec((1, 3 * E), lambda i, k: (0, 0)),      # b_qkv
            ],
            out_specs=pl.BlockSpec((bm, 3 * E), lambda i, k: (i, 0)),
            scratch_shapes=[pltpu.VMEM((bm, E), jnp.float32)],
        ),
        compiler_params=pltpu.CompilerParams(
            dimension_semantics=("parallel", "arbitrary"),
            vmem_limit_bytes=vmem_limit,
        ),
    )(xc, wemb, bemb, wqkv, bqkv)

    # Free row-major view: (B, 3E) == (W, N, 3E).  No transpose, no split, no copy.
    qkv3 = qkv.reshape(W, N, 3 * E)

    # -------- Kernel B: batched attention (all groups/heads) + out projection --------
    bn = _pick_bn(N, W, E)
    grid_b = (N // bn,)

    out2d = pl.pallas_call(
        functools.partial(_attn_outproj_kernel, num_heads=H, head_dim=Dh,
                          embed_dim=E, window=W, groups_per_block=bn,
                          scale=1.0 / math.sqrt(Dh)),
        out_shape=jax.ShapeDtypeStruct((W, N * E), jnp.float32),    # lane-dense slab
        grid_spec=pltpu.PrefetchScalarGridSpec(
            num_scalar_prefetch=0,
            grid=grid_b,
            in_specs=[
                pl.BlockSpec((W, bn, 3 * E), lambda g: (0, g, 0)),  # qkv (W,N,3E) view
                pl.BlockSpec((E, E), lambda g: (0, 0)),             # Wout^T
                pl.BlockSpec((1, E), lambda g: (0, 0)),             # b_out
            ],
            out_specs=pl.BlockSpec((W, bn * E), lambda g: (0, g)),
        ),
        compiler_params=pltpu.CompilerParams(
            dimension_semantics=("parallel",),
            vmem_limit_bytes=vmem_limit,
        ),
    )(qkv3, wout, bout)

    # Free row-major view back to the module's output layout.
    return out2d.reshape(W, N, E)  # (window_size, batch // window_size, embed_dim)


def init_params(key, num_items, embed_dim):
    # Shapes mirror the PyTorch parameters:
    #   embedding: Linear(num_items, E) -> W (E, num_items), b (E,)
    #   attention: in_proj_weight (3E, E), in_proj_bias (3E,),
    #              out_proj.weight (E, E), out_proj.bias (E,)
    ks = jax.random.split(key, 6)
    s = 0.05
    w_emb = jax.random.normal(ks[0], (embed_dim, num_items), jnp.float32) * s
    b_emb = jax.random.normal(ks[1], (embed_dim,), jnp.float32) * s
    w_in = jax.random.normal(ks[2], (3 * embed_dim, embed_dim), jnp.float32) * s
    b_in = jax.random.normal(ks[3], (3 * embed_dim,), jnp.float32) * s
    w_out = jax.random.normal(ks[4], (embed_dim, embed_dim), jnp.float32) * s
    b_out = jax.random.normal(ks[5], (embed_dim,), jnp.float32) * s
    return {
        "w_emb_t": w_emb.T,           # (num_items, E)
        "b_emb": b_emb[None, :],      # (1, E)
        "w_qkv_t": w_in.T,            # (E, 3E)
        "b_qkv": b_in[None, :],       # (1, 3E)
        "w_out_t": w_out.T,           # (E, E)
        "b_out": b_out[None, :],      # (1, E)
    }


def reference_forward(x, params, *, window_size, num_heads):
    # Pure-JAX f32 reference mirroring torch.nn.MultiheadAttention semantics.
    emb = x @ params["w_emb_t"] + params["b_emb"]
    B, E = emb.shape
    W, N, H, Dh = window_size, B // window_size, num_heads, E // num_heads
    qkv = emb @ params["w_qkv_t"] + params["b_qkv"]
    q, k, v = jnp.split(qkv, 3, axis=-1)

    def to_heads(t):
        return t.reshape(W, N, H, Dh).transpose(1, 2, 0, 3)

    qh, kh, vh = to_heads(q), to_heads(k), to_heads(v)
    s = jnp.einsum("nhwd,nhvd->nhwv", qh, kh) / jnp.sqrt(jnp.float32(Dh))
    p = jax.nn.softmax(s, axis=-1)
    ctx = jnp.einsum("nhwv,nhvd->nhwd", p, vh)
    ctx2d = ctx.transpose(2, 0, 1, 3).reshape(B, E)
    out = ctx2d @ params["w_out_t"] + params["b_out"]
    return out.reshape(W, N, E)


if __name__ == "__main__":
    # Small shapes consistent with the module's forward:
    #   rating_matrix: (batch_size, num_items); batch_size divisible by window_size.
    batch_size = 16
    num_items = 384        # bk=128 -> 3 reduction steps, exercises the pl.when acc path
    embed_dim = 64
    num_heads = 4
    window_size = 4

    key = jax.random.PRNGKey(0)
    k_x, k_p = jax.random.split(key)
    rating_matrix = jax.random.normal(k_x, (batch_size, num_items), jnp.float32)
    params = init_params(k_p, num_items, embed_dim)

    out = user_attention_forward(rating_matrix, params,
                                 window_size=window_size, num_heads=num_heads)
    out = jax.block_until_ready(out)

    ref = reference_forward(rating_matrix, params,
                            window_size=window_size, num_heads=num_heads)
    assert out.shape == (window_size, batch_size // window_size, embed_dim)
    # bf16 MXU inputs + approx reciprocal -> loosened tolerance vs the f32 reference.
    assert jnp.allclose(out, ref, atol=2e-2, rtol=2e-2), "Pallas output mismatch vs reference"

    print("KERNEL_OK")
</pallas_src>

<mosaic_0001>
module attributes {stable_mosaic.version = 11 : i64} {
  func.func @_embed_qkv_kernel(%arg0: i32, %arg1: i32, %arg2: memref<16x128xbf16, #tpu.memory_space<vmem>>, %arg3: memref<128x64xbf16, #tpu.memory_space<vmem>>, %arg4: memref<1x64xf32, #tpu.memory_space<vmem>>, %arg5: memref<64x192xbf16, #tpu.memory_space<vmem>>, %arg6: memref<1x192xf32, #tpu.memory_space<vmem>>, %arg7: memref<16x192xbf16, #tpu.memory_space<vmem>>, %arg8: memref<16x64xf32, #tpu.memory_space<vmem>>) attributes {dimension_semantics = [#tpu.dimension_semantics<parallel>, #tpu.dimension_semantics<arbitrary>], iteration_bounds = array<i64: 1, 3>, scalar_prefetch = 0 : i64, scratch_operands = 1 : i64, tpu.core_type = #tpu.core_type<tc>, window_params = [{transform_indices = @transform_0, window_bounds = array<i64: 16, 128>}, {transform_indices = @transform_1, window_bounds = array<i64: 128, 64>}, {pipeline_mode = #tpu.pipeline_mode<synchronous>, transform_indices = @transform_2, window_bounds = array<i64: 1, 64>}, {pipeline_mode = #tpu.pipeline_mode<synchronous>, transform_indices = @transform_3, window_bounds = array<i64: 64, 192>}, {pipeline_mode = #tpu.pipeline_mode<synchronous>, transform_indices = @transform_4, window_bounds = array<i64: 1, 192>}, {transform_indices = @transform_5, window_bounds = array<i64: 16, 192>}]} {
    %c0_i32 = arith.constant 0 : i32
    %0 = arith.cmpi eq, %arg1, %c0_i32 : i32
    %1 = arith.extui %0 : i1 to i32
    %c0_i32_0 = arith.constant 0 : i32
    %2 = arith.cmpi ne, %1, %c0_i32_0 : i32
    scf.if %2 {
      %cst_9 = arith.constant 0.000000e+00 : f32
      %12 = vector.broadcast %cst_9 : f32 to vector<16x64xf32>
      %c0_10 = arith.constant 0 : index
      %c0_11 = arith.constant 0 : index
      %13 = vector.load %arg8[%c0_10, %c0_11] : memref<16x64xf32, #tpu.memory_space<vmem>>, vector<16x64xf32>
      tpu.vector_store %arg8[%c0_10, %c0_11], %12 {strides = array<i32>} : memref<16x64xf32, #tpu.memory_space<vmem>>, vector<16x64xf32>,
    } else {
    }
    %c0 = arith.constant 0 : index
    %c0_1 = arith.constant 0 : index
    %3 = vector.load %arg8[%c0, %c0_1] : memref<16x64xf32, #tpu.memory_space<vmem>>, vector<16x64xf32>
    %c0_2 = arith.constant 0 : index
    %c0_3 = arith.constant 0 : index
    %4 = vector.load %arg2[%c0_2, %c0_3] : memref<16x128xbf16, #tpu.memory_space<vmem>>, vector<16x128xbf16>
    %c0_4 = arith.constant 0 : index
    %c0_5 = arith.constant 0 : index
    %5 = vector.load %arg3[%c0_4, %c0_5] : memref<128x64xbf16, #tpu.memory_space<vmem>>, vector<128x64xbf16>
    %cst = arith.constant dense<0.000000e+00> : vector<16x64xf32>
    %6 = tpu.matmul %4, %5, %cst {dimension_numbers = #tpu.dot_dimension_numbers<[1], [0], [0], [1], [0, 0, 1, 1], [], []>} : vector<16x128xbf16>, vector<128x64xbf16>, vector<16x64xf32> -> vector<16x64xf32>
    %7 = arith.addf %3, %6 : vector<16x64xf32>
    %c0_6 = arith.constant 0 : index
    %c0_7 = arith.constant 0 : index
    %8 = vector.load %arg8[%c0_6, %c0_7] : memref<16x64xf32, #tpu.memory_space<vmem>>, vector<16x64xf32>
    tpu.vector_store %arg8[%c0_6, %c0_7], %7 {strides = array<i32>} : memref<16x64xf32, #tpu.memory_space<vmem>>, vector<16x64xf32>,
    %c2_i32 = arith.constant 2 : i32
    %9 = arith.cmpi eq, %arg1, %c2_i32 : i32
    %10 = arith.extui %9 : i1 to i32
    %c0_i32_8 = arith.constant 0 : i32
    %11 = arith.cmpi ne, %10, %c0_i32_8 : i32
    scf.if %11 {
      %c0_9 = arith.constant 0 : index
      %c0_10 = arith.constant 0 : index
      %12 = vector.load %arg8[%c0_9, %c0_10] : memref<16x64xf32, #tpu.memory_space<vmem>>, vector<16x64xf32>
      %c0_11 = arith.constant 0 : index
      %c0_12 = arith.constant 0 : index
      %13 = vector.load %arg4[%c0_11, %c0_12] : memref<1x64xf32, #tpu.memory_space<vmem>>, vector<1x64xf32>
      %14 = vector.broadcast %13 : vector<1x64xf32> to vector<16x64xf32>
      %15 = arith.addf %12, %14 : vector<16x64xf32>
      %16 = arith.truncf %15 : vector<16x64xf32> to vector<16x64xbf16>
      %c0_13 = arith.constant 0 : index
      %c0_14 = arith.constant 0 : index
      %17 = vector.load %arg5[%c0_13, %c0_14] : memref<64x192xbf16, #tpu.memory_space<vmem>>, vector<64x192xbf16>
      %cst_15 = arith.constant dense<0.000000e+00> : vector<16x192xf32>
      %18 = tpu.matmul %16, %17, %cst_15 {dimension_numbers = #tpu.dot_dimension_numbers<[1], [0], [0], [1], [0, 0, 1, 1], [], []>} : vector<16x64xbf16>, vector<64x192xbf16>, vector<16x192xf32> -> vector<16x192xf32>
      %c0_16 = arith.constant 0 : index
      %c0_17 = arith.constant 0 : index
      %19 = vector.load %arg6[%c0_16, %c0_17] : memref<1x192xf32, #tpu.memory_space<vmem>>, vector<1x192xf32>
      %20 = vector.broadcast %19 : vector<1x192xf32> to vector<16x192xf32>
      %21 = arith.addf %18, %20 : vector<16x192xf32>
      %22 = arith.truncf %21 : vector<16x192xf32> to vector<16x192xbf16>
      %c0_18 = arith.constant 0 : index
      %c0_19 = arith.constant 0 : index
      %23 = vector.load %arg7[%c0_18, %c0_19] : memref<16x192xbf16, #tpu.memory_space<vmem>>, vector<16x192xbf16>
      tpu.vector_store %arg7[%c0_18, %c0_19], %22 {strides = array<i32>} : memref<16x192xbf16, #tpu.memory_space<vmem>>, vector<16x192xbf16>,
    } else {
    }
    return
  }
  func.func @transform_0(%arg0: i32, %arg1: i32) -> (i32, i32) {
    %c0_i32 = arith.constant 0 : i32
    return %arg0, %arg1 : i32, i32
  }
  func.func @transform_1(%arg0: i32, %arg1: i32) -> (i32, i32) {
    %c0_i32 = arith.constant 0 : i32
    %c0_i32_0 = arith.constant 0 : i32
    return %arg1, %c0_i32 : i32, i32
  }
  func.func @transform_2(%arg0: i32, %arg1: i32) -> (i32, i32) {
    %c0_i32 = arith.constant 0 : i32
    %c0_i32_0 = arith.constant 0 : i32
    %c0_i32_1 = arith.constant 0 : i32
    return %c0_i32, %c0_i32_0 : i32, i32
  }
  func.func @transform_3(%arg0: i32, %arg1: i32) -> (i32, i32) {
    %c0_i32 = arith.constant 0 : i32
    %c0_i32_0 = arith.constant 0 : i32
    %c0_i32_1 = arith.constant 0 : i32
    return %c0_i32, %c0_i32_0 : i32, i32
  }
  func.func @transform_4(%arg0: i32, %arg1: i32) -> (i32, i32) {
    %c0_i32 = arith.constant 0 : i32
    %c0_i32_0 = arith.constant 0 : i32
    %c0_i32_1 = arith.constant 0 : i32
    return %c0_i32, %c0_i32_0 : i32, i32
  }
  func.func @transform_5(%arg0: i32, %arg1: i32) -> (i32, i32) {
    %c0_i32 = arith.constant 0 : i32
    %c0_i32_0 = arith.constant 0 : i32
    return %arg0, %c0_i32 : i32, i32
  }
}

</mosaic_0001>

<llo_original>
// kernel: tpu_custom_call.1
$region0: #{tpu_custom_call.1}
  #allocation0 [shape = 'u32[]', space=smem, size = 0x4, offset = 0x4, fixed_abs, tag = 'smem constant byte address 0x4 - core index']
  #allocation1 [shape = 'u32[144,128]{1,0:T(1,128)}', space=vmem, size = 0x12000, scoped, tag = 'internal scratch']
  #allocation2 [shape = 'f32[16,64]{1,0:T(8,128)}', space=vmem, size = 0x2000, scoped, tag = 'scratch operand']
  %s0 = inlined_call_operand.hbm [shape: bf16[16,384], index: 0, kind: input, shape index: {}]
  %s1 = inlined_call_operand.hbm [shape: bf16[384,64], index: 1, kind: input, shape index: {}]
  %s2 = inlined_call_operand.hbm [shape: f32[1,64], index: 2, kind: input, shape index: {}]
  %s3 = inlined_call_operand.hbm [shape: bf16[64,192], index: 3, kind: input, shape index: {}]
  %s4 = inlined_call_operand.hbm [shape: f32[1,192], index: 4, kind: input, shape index: {}]
  %s5 = inlined_call_operand.hbm [shape: bf16[16,192], index: 5, kind: output, shape index: {}]
  %s6 = sld [smem:[#allocation0]]
  $region81: #{tpu_custom_call.1} parent=0
    _
  %s8 = ssub.s32 1, %s6
  %s9 = scalar_select 0, %s8, %s6
  $region1: #{tpu_custom_call.1} parent=0
    #allocation3 [shape = 'u8[8192]{0}', space=vmem, size = 0x2000, scoped, tag = 'input window, operand 0']
    #allocation4 [shape = 's32[2]{0}', space=sflag, size = 0x8, scoped, tag = 'scoped memory for tpu_custom_call.1']
    #allocation5 [shape = 's32[2]{0}', space=sflag, size = 0x8, scoped, tag = 'scoped memory for tpu_custom_call.1']
    #allocation6 [shape = 'u8[65536]{0}', space=vmem, size = 0x10000, scoped, tag = 'input window, operand 1']
    #allocation7 [shape = 's32[2]{0}', space=sflag, size = 0x8, scoped, tag = 'scoped memory for tpu_custom_call.1']
    #allocation8 [shape = 'u8[512]{0}', space=vmem, size = 0x400, scoped, tag = 'input window, operand 2, single buffered']
    #allocation9 [shape = 'u8[32768]{0}', space=vmem, size = 0x8000, scoped, tag = 'input window, operand 3, single buffered']
    #allocation10 [shape = 's32[1]{0}', space=sflag, size = 0x4, scoped, tag = 'scoped memory for tpu_custom_call.1']
    #allocation11 [shape = 'u8[1024]{0}', space=vmem, size = 0x400, scoped, tag = 'input window, operand 4, single buffered']
    #allocation12 [shape = 'u8[8192]{0}', space=vmem, size = 0x2000, scoped, tag = 'output window, operand 0, single buffered']
    %10 = vsyncpa [#allocation4], 0
    %s11 = scalar_lea.sflag [#allocation4], 1
    %12 = vsyncpa %s11, 0
    %13 = vsyncpa [#allocation7], 0
    %s14 = scalar_lea.sflag [#allocation7], 1
    %15 = vsyncpa %s14, 0
    %16 = vsyncpa [#allocation10], 0
    %17 = vsyncpa [#allocation5], 0
    loop: start=0, step=1, limit=5
    $region2: #{tpu_custom_call.1} parent=1 // loop_pre_header
      _
    $region3: #{tpu_custom_call.1} parent=1 // loop_header
      %s19 = sphi 0, %s23
      %p20 = scmp.ge.s32.totalorder %s19, 5
      %s26 = sphi 0, %s38
      %s27 = sphi 0, %s34
      %s28 = sphi 0, %s26
      %s29 = sphi 0, %s27
      %s30 = sphi 0, %s28
      %s31 = sphi 0, %s29
      %s43 = sphi 0, %s45
      %s46 = sphi 0, %s43
      %s47 = sphi 0, %s46
      %s63 = sphi 0, %s47
      %s69 = sphi 0, %s71
      %s72 = sphi 0, %s69
      %s73 = sphi 0, %s72
      %s89 = sphi 0, %s73
      %s93 = sphi 0, %s93
      %s95 = sphi 0, %s93
      %s96 = sphi 0, %s95
      %s110 = sphi 0, %s96
      %s114 = sphi 0, %s114
      %s116 = sphi 0, %s114
      %s117 = sphi 0, %s116
      %s131 = sphi 0, %s117
      %s135 = sphi 0, %s135
      %s137 = sphi 0, %s135
      %s138 = sphi 0, %s137
      %s152 = sphi 0, %s138
      %s158 = sphi 0, %s160
      %s161 = sphi 0, %s158
      %s162 = sphi 0, %s161
      %s178 = sphi 0, %s162
    $region4: #{tpu_custom_call.1} parent=1 // loop_header_branch
      %22 = sbr.rel (%p20) target = $region8
    $region5: #{tpu_custom_call.1} parent=1 // loop_body
      %s24 = ssub.s32 %s19, 1
      %s25 = ssub.s32 %s19, 2
      %s32 = sadd.s32 1, %s27
      %p33 = scmp.ge.s32.totalorder %s32, 3
      %s34 = scalar_select %p33, 0, %s32
      %s35 = sadd.s32 1, %s26
      %s36 = scalar_select %p33, %s35, %s26
      %p37 = scmp.ge.s32.totalorder %s36, 1
      %s38 = scalar_select %p37, 0, %s36
      %s39 = ssub.s32 %s26, %s38
      %s40 = ssub.s32 %s27, %s34
      %s41 = sor.u32 %s39, %s40
      %p42 = scmp.eq.s32.totalorder %s41, 0
      %s44 = sadd.s32 %s43, 1
      %s45 = scalar_select %p42, %s43, %s44
      %p48 = pneg %p42
      %p49 = scmp.eq.s32.totalorder %s19, 2
      %p50 = por %p48, %p49
      %p51 = scmp.ne.s32.totalorder %s43, %s46
      %p52 = scmp.eq.s32.totalorder %s19, 0
      %p53 = por %p51, %p52
      %p54 = scmp.ne.s32.totalorder %s43, %s46
      %p55 = scmp.eq.s32.totalorder %s24, 2
      %p56 = por %p54, %p55
      %p57 = scmp.ne.s32.totalorder %s46, %s47
      %p58 = scmp.eq.s32.totalorder %s24, 0
      %p59 = por %p57, %p58
      %p60 = scmp.ne.s32.totalorder %s46, %s47
      %p61 = scmp.eq.s32.totalorder %s25, 2
      %p62 = por %p60, %p61
      %p64 = scmp.ne.s32.totalorder %s47, %s63
      %p65 = scmp.eq.s32.totalorder %s25, 0
      %p66 = por %p64, %p65
      %s67 = ssub.s32 %s27, %s34
      %p68 = scmp.eq.s32.totalorder %s67, 0
      %s70 = sadd.s32 %s69, 1
      %s71 = scalar_select %p68, %s69, %s70
      %p74 = pneg %p68
      %p75 = scmp.eq.s32.totalorder %s19, 2
      %p76 = por %p74, %p75
      %p77 = scmp.ne.s32.totalorder %s69, %s72
      %p78 = scmp.eq.s32.totalorder %s19, 0
      %p79 = por %p77, %p78
      %p80 = scmp.ne.s32.totalorder %s69, %s72
      %p81 = scmp.eq.s32.totalorder %s24, 2
      %p82 = por %p80, %p81
      %p83 = scmp.ne.s32.totalorder %s72, %s73
      %p84 = scmp.eq.s32.totalorder %s24, 0
      %p85 = por %p83, %p84
      %p86 = scmp.ne.s32.totalorder %s72, %s73
      %p87 = scmp.eq.s32.totalorder %s25, 2
      %p88 = por %p86, %p87
      %p90 = scmp.ne.s32.totalorder %s73, %s89
      %p91 = scmp.eq.s32.totalorder %s25, 0
      %p92 = por %p90, %p91
      %s94 = sadd.s32 %s93, 1
      %p97 = scmp.eq.s32.totalorder %s19, 2
      %p98 = scmp.ne.s32.totalorder %s93, %s95
      %p99 = scmp.eq.s32.totalorder %s19, 0
      %p100 = por %p98, %p99
      %p101 = scmp.ne.s32.totalorder %s93, %s95
      %p102 = scmp.eq.s32.totalorder %s24, 2
      %p103 = por %p101, %p102
      %p104 = scmp.ne.s32.totalorder %s95, %s96
      %p105 = scmp.eq.s32.totalorder %s24, 0
      %p106 = por %p104, %p105
      %p107 = scmp.ne.s32.totalorder %s95, %s96
      %p108 = scmp.eq.s32.totalorder %s25, 2
      %p109 = por %p107, %p108
      %p111 = scmp.ne.s32.totalorder %s96, %s110
      %p112 = scmp.eq.s32.totalorder %s25, 0
      %p113 = por %p111, %p112
      %s115 = sadd.s32 %s114, 1
      %p118 = scmp.eq.s32.totalorder %s19, 2
      %p119 = scmp.ne.s32.totalorder %s114, %s116
      %p120 = scmp.eq.s32.totalorder %s19, 0
      %p121 = por %p119, %p120
      %p122 = scmp.ne.s32.totalorder %s114, %s116
      %p123 = scmp.eq.s32.totalorder %s24, 2
      %p124 = por %p122, %p123
      %p125 = scmp.ne.s32.totalorder %s116, %s117
      %p126 = scmp.eq.s32.totalorder %s24, 0
      %p127 = por %p125, %p126
      %p128 = scmp.ne.s32.totalorder %s116, %s117
      %p129 = scmp.eq.s32.totalorder %s25, 2
      %p130 = por %p128, %p129
      %p132 = scmp.ne.s32.totalorder %s117, %s131
      %p133 = scmp.eq.s32.totalorder %s25, 0
      %p134 = por %p132, %p133
      %s136 = sadd.s32 %s135, 1
      %p139 = scmp.eq.s32.totalorder %s19, 2
      %p140 = scmp.ne.s32.totalorder %s135, %s137
      %p141 = scmp.eq.s32.totalorder %s19, 0
      %p142 = por %p140, %p141
      %p143 = scmp.ne.s32.totalorder %s135, %s137
      %p144 = scmp.eq.s32.totalorder %s24, 2
      %p145 = por %p143, %p144
      %p146 = scmp.ne.s32.totalorder %s137, %s138
      %p147 = scmp.eq.s32.totalorder %s24, 0
      %p148 = por %p146, %p147
      %p149 = scmp.ne.s32.totalorder %s137, %s138
      %p150 = scmp.eq.s32.totalorder %s25, 2
      %p151 = por %p149, %p150
      %p153 = scmp.ne.s32.totalorder %s138, %s152
      %p154 = scmp.eq.s32.totalorder %s25, 0
      %p155 = por %p153, %p154
      %s156 = ssub.s32 %s26, %s38
      %p157 = scmp.eq.s32.totalorder %s156, 0
      %s159 = sadd.s32 %s158, 1
      %s160 = scalar_select %p157, %s158, %s159
      %p163 = pneg %p157
      %p164 = scmp.eq.s32.totalorder %s19, 2
      %p165 = por %p163, %p164
      %p166 = scmp.ne.s32.totalorder %s158, %s161
      %p167 = scmp.eq.s32.totalorder %s19, 0
      %p168 = por %p166, %p167
      %p169 = scmp.ne.s32.totalorder %s158, %s161
      %p170 = scmp.eq.s32.totalorder %s24, 2
      %p171 = por %p169, %p170
      %p172 = scmp.ne.s32.totalorder %s161, %s162
      %p173 = scmp.eq.s32.totalorder %s24, 0
      %p174 = por %p172, %p173
      %p175 = scmp.ne.s32.totalorder %s161, %s162
      %p176 = scmp.eq.s32.totalorder %s25, 2
      %p177 = por %p175, %p176
      %p179 = scmp.ne.s32.totalorder %s162, %s178
      %p180 = scmp.eq.s32.totalorder %s25, 0
      %p181 = por %p179, %p180
      %p182 = scmp.le.s32.totalorder 1, %s19
      %p183 = scmp.lt.s32.totalorder %s19, 4
      %p184 = pnand %p182, %p183
      %p185 = pneg %p184
      // Predicated region
      $region9: #{tpu_custom_call.1} parent=5 // pred_check
        _
      $region10: #{tpu_custom_call.1} parent=5 // pred_check_branch
        %187 = sbr.rel (%p184) target = $region12
      $region11: #{tpu_custom_call.1} parent=5 // pred_region
        %s188 = ssub.s32 %s19, 1
        // Predicated region
        $region13: #{tpu_custom_call.1} parent=11 // pred_check
          %p189 = pneg %p106
        $region14: #{tpu_custom_call.1} parent=11 // pred_check_branch
          %191 = sbr.rel (%p189) target = $region16
        $region15: #{tpu_custom_call.1} parent=11 // pred_region
          %s193 = ssub.s32 16, 16
          %194 = vsyncadd [#allocation7], %s193
          %s196 = sshll.u32 [#allocation8], 4
          %s197 = int_to_ptr.vmem [resolvable:$true] %s196
          %199 = dma.hbm_to_vmem [thread:$0]  %s2, 16, %s197, [#allocation7]
        $region16: #{tpu_custom_call.1} parent=11 // pred_fallthru
          _
        // Predicated region
        $region17: #{tpu_custom_call.1} parent=11 // pred_check
          %p200 = pneg %p127
        $region18: #{tpu_custom_call.1} parent=11 // pred_check_branch
          %202 = sbr.rel (%p200) target = $region20
        $region19: #{tpu_custom_call.1} parent=11 // pred_region
          %s204 = ssub.s32 1024, 1024
          %205 = vsyncadd [#allocation10], %s204
          %s206 = sshll.u32 [#allocation9], 4
          %s207 = int_to_ptr.vmem [resolvable:$true] %s206
          %212 = dma.hbm_to_vmem [thread:$0]  %s3, 1024, %s207, [#allocation10], 128, 128, 8
        $region20: #{tpu_custom_call.1} parent=11 // pred_fallthru
          _
        // Predicated region
        $region21: #{tpu_custom_call.1} parent=11 // pred_check
          %p213 = pneg %p148
        $region22: #{tpu_custom_call.1} parent=11 // pred_check_branch
          %215 = sbr.rel (%p213) target = $region24
        $region23: #{tpu_custom_call.1} parent=11 // pred_region
          %s217 = ssub.s32 32, 32
          %218 = vsyncadd [#allocation10], %s217
          %s220 = sshll.u32 [#allocation11], 4
          %s221 = int_to_ptr.vmem [resolvable:$true] %s220
          %223 = dma.hbm_to_vmem [thread:$0]  %s4, 32, %s221, [#allocation10]
        $region24: #{tpu_custom_call.1} parent=11 // pred_fallthru
          _
      $region12: #{tpu_custom_call.1} parent=5 // pred_fallthru
        _
      %p224 = scmp.lt.s32.totalorder %s19, 3
      // Predicated region
      $region25: #{tpu_custom_call.1} parent=5 // pred_check
        %p225 = pneg %p224
      $region26: #{tpu_custom_call.1} parent=5 // pred_check_branch
        %227 = sbr.rel (%p225) target = $region28
      $region27: #{tpu_custom_call.1} parent=5 // pred_region
        // Predicated region
        $region29: #{tpu_custom_call.1} parent=27 // pred_check
          %p228 = pneg %p53
        $region30: #{tpu_custom_call.1} parent=27 // pred_check_branch
          %230 = sbr.rel (%p228) target = $region32
        $region31: #{tpu_custom_call.1} parent=27 // pred_region
          %s231 = sand.u32 %s43, 1
          %s232 = scalar_lea.sflag [#allocation4], %s231
          %s233 = sand.u32 %s43, 1
          %s234 = smul.addr %s233, 8
          %s235 = scalar_lea.vmem [#allocation3], %s234
          %s236 = smul.u32 2, %s26
          %s238 = ssub.s32 128, 128
          %239 = vsyncadd %s232, %s238
          %s240 = smul.addr %s236, 3
          %s241 = sadd.s32 %s27, %s240
          %s242 = smul.addr %s241, 64
          %s243 = scalar_lea.hbm %s0, %s242
          %s244 = sshll.u32 %s235, 4
          %s245 = int_to_ptr.vmem [resolvable:$true] %s244
          %250 = dma.hbm_to_vmem [thread:$0]  %s243, 128, %s245, %s232, 192, 64, 4
        $region32: #{tpu_custom_call.1} parent=27 // pred_fallthru
          _
        // Predicated region
        $region33: #{tpu_custom_call.1} parent=27 // pred_check
          %p251 = pneg %p79
        $region34: #{tpu_custom_call.1} parent=27 // pred_check_branch
          %253 = sbr.rel (%p251) target = $region36
        $region35: #{tpu_custom_call.1} parent=27 // pred_region
          %s254 = sand.u32 %s19, 1
          %s255 = scalar_lea.sflag [#allocation7], %s254
          %s256 = sand.u32 %s69, 1
          %s257 = smul.addr %s256, 64
          %s258 = scalar_lea.vmem [#allocation6], %s257
          %s259 = smul.u32 16, %s27
          %s261 = ssub.s32 1024, 1024
          %262 = vsyncadd %s255, %s261
          %s263 = smul.addr %s259, 64
          %s264 = scalar_lea.hbm %s1, %s263
          %s265 = sshll.u32 %s258, 4
          %s266 = int_to_ptr.vmem [resolvable:$true] %s265
          %271 = dma.hbm_to_vmem [thread:$0]  %s264, 1024, %s266, %s255, 64, 64, 4
        $region36: #{tpu_custom_call.1} parent=27 // pred_fallthru
          _
      $region28: #{tpu_custom_call.1} parent=5 // pred_fallthru
        _
      %p272 = scmp.le.s32.totalorder 1, %s19
      %p273 = scmp.lt.s32.totalorder %s19, 4
      %p274 = pnand %p272, %p273
      %p275 = pneg %p274
      // Predicated region
      $region37: #{tpu_custom_call.1} parent=5 // pred_check
        _
      $region38: #{tpu_custom_call.1} parent=5 // pred_check_branch
        %277 = sbr.rel (%p274) target = $region40
      $region39: #{tpu_custom_call.1} parent=5 // pred_region
        %s278 = ssub.s32 %s19, 1
        %s279 = sand.u32 %s46, 1
        %s280 = scalar_lea.sflag [#allocation4], %s279
        %s281 = sand.u32 %s46, 1
        %s282 = smul.addr %s281, 8
        %s283 = scalar_lea.vmem [#allocation3], %s282
        // Predicated region
        $region41: #{tpu_custom_call.1} parent=39 // pred_check
          %p284 = pneg %p59
        $region42: #{tpu_custom_call.1} parent=39 // pred_check_branch
          %286 = sbr.rel (%p284) target = $region44
        $region43: #{tpu_custom_call.1} parent=39 // pred_region
          %287 = dma.done %s280, 128
        $region44: #{tpu_custom_call.1} parent=39 // pred_fallthru
          _
        %s288 = sand.u32 %s24, 1
        %s289 = scalar_lea.sflag [#allocation7], %s288
        %s290 = sand.u32 %s72, 1
        %s291 = smul.addr %s290, 64
        %s292 = scalar_lea.vmem [#allocation6], %s291
        // Predicated region
        $region45: #{tpu_custom_call.1} parent=39 // pred_check
          %p293 = pneg %p85
        $region46: #{tpu_custom_call.1} parent=39 // pred_check_branch
          %295 = sbr.rel (%p293) target = $region48
        $region47: #{tpu_custom_call.1} parent=39 // pred_region
          %296 = dma.done %s289, 1024
        $region48: #{tpu_custom_call.1} parent=39 // pred_fallthru
          _
        // Predicated region
        $region49: #{tpu_custom_call.1} parent=39 // pred_check
          %p297 = pneg %p106
        $region50: #{tpu_custom_call.1} parent=39 // pred_check_branch
          %299 = sbr.rel (%p297) target = $region52
        $region51: #{tpu_custom_call.1} parent=39 // pred_region
          %300 = dma.done [#allocation7], 16
        $region52: #{tpu_custom_call.1} parent=39 // pred_fallthru
          _
        // Predicated region
        $region53: #{tpu_custom_call.1} parent=39 // pred_check
          %p301 = pneg %p127
        $region54: #{tpu_custom_call.1} parent=39 // pred_check_branch
          %303 = sbr.rel (%p301) target = $region56
        $region55: #{tpu_custom_call.1} parent=39 // pred_region
          %304 = dma.done [#allocation10], 1024
        $region56: #{tpu_custom_call.1} parent=39 // pred_fallthru
          _
        // Predicated region
        $region57: #{tpu_custom_call.1} parent=39 // pred_check
          %p305 = pneg %p148
        $region58: #{tpu_custom_call.1} parent=39 // pred_check_branch
          %307 = sbr.rel (%p305) target = $region60
        $region59: #{tpu_custom_call.1} parent=39 // pred_region
          %308 = dma.done [#allocation10], 32
        $region60: #{tpu_custom_call.1} parent=39 // pred_fallthru
          _
        %s309 = sand.u32 %s46, 1
        %s310 = scalar_lea.sflag [#allocation4], %s309
        %s311 = sand.u32 %s46, 1
        %s312 = smul.addr %s311, 8
        %s313 = scalar_lea.vmem [#allocation3], %s312
        %p314 = pneg %p59
        %p315 = pneg %p56
        %s316 = sand.u32 %s24, 1
        %s317 = scalar_lea.sflag [#allocation7], %s316
        %s318 = sand.u32 %s72, 1
        %s319 = smul.addr %s318, 64
        %s320 = scalar_lea.vmem [#allocation6], %s319
        %p321 = pneg %p85
        %p322 = pneg %p82
        %p323 = pneg %p106
        %p324 = pneg %p103
        %p325 = pneg %p127
        %p326 = pneg %p124
        %p327 = pneg %p148
        %p328 = pneg %p145
        %p329 = pneg %p174
        %p330 = pneg %p171
        %s331 = smul.u32 2, %s28
        %s332 = smul.u32 16, %s29
        %s333 = smul.u32 2, %s28
        %p335 = scmp.eq.s32.totalorder %s29, 0
        // Predicated region
        $region61: #{tpu_custom_call.1} parent=39 // pred_check
          %p336 = pneg %p335
        $region62: #{tpu_custom_call.1} parent=39 // pred_check_branch
          %338 = sbr.rel (%p336) target = $region64
        $region63: #{tpu_custom_call.1} parent=39 // pred_region
          %vm339 = vcmask 523264
          %340 = vst.msk [vmem:[#allocation2] sm:$0xff] %vm339, 0.0
          %341 = vst.msk [vmem:[#allocation2 + $0x8] sm:$0xff] %vm339, 0.0
        $region64: #{tpu_custom_call.1} parent=39 // pred_fallthru
          _
        %v342 = vld [vmem:[#allocation2] sm:$0xff]
        %v343 = vld [vmem:[#allocation2 + $0x8] sm:$0xff]
        %v344 = vld [vmem:[%s283] sm:$0xf]
        %v345 = vld [vmem:[%s283 + $0x4] sm:$0xf]
        %v346 = vld [vmem:[%s292] sm:$0xf]
        %v347 = vld [vmem:[%s292 + $0x4] sm:$0xf]
        %v348 = vld [vmem:[%s292 + $0x8] sm:$0xf]
        %v349 = vld [vmem:[%s292 + $0xc] sm:$0xf]
        %v350 = vld [vmem:[%s292 + $0x10] sm:$0xf]
        %v351 = vld [vmem:[%s292 + $0x14] sm:$0xf]
        %v352 = vld [vmem:[%s292 + $0x18] sm:$0xf]
        %v353 = vld [vmem:[%s292 + $0x1c] sm:$0xf]
        %v354 = vld [vmem:[%s292 + $0x20] sm:$0xf]
        %v355 = vld [vmem:[%s292 + $0x24] sm:$0xf]
        %v356 = vld [vmem:[%s292 + $0x28] sm:$0xf]
        %v357 = vld [vmem:[%s292 + $0x2c] sm:$0xf]
        %v358 = vld [vmem:[%s292 + $0x30] sm:$0xf]
        %v359 = vld [vmem:[%s292 + $0x34] sm:$0xf]
        %v360 = vld [vmem:[%s292 + $0x38] sm:$0xf]
        %v361 = vld [vmem:[%s292 + $0x3c] sm:$0xf]
        %v364 = vunpack.c.l.b16 %v344
        %v365 = vunpack.c.l.b16 %v345
        %v366 = vpack.c.b16 %v365, %v364
        %v384 = vunpack.c.l.b16 %v346
        %v385 = vunpack.c.l.b16 %v347
        %v386 = vunpack.c.l.b16 %v348
        %v387 = vunpack.c.l.b16 %v349
        %v388 = vunpack.c.l.b16 %v350
        %v389 = vunpack.c.l.b16 %v351
        %v390 = vunpack.c.l.b16 %v352
        %v391 = vunpack.c.l.b16 %v353
        %v392 = vunpack.c.l.b16 %v354
        %v393 = vunpack.c.l.b16 %v355
        %v394 = vunpack.c.l.b16 %v356
        %v395 = vunpack.c.l.b16 %v357
        %v396 = vunpack.c.l.b16 %v358
        %v397 = vunpack.c.l.b16 %v359
        %v398 = vunpack.c.l.b16 %v360
        %v399 = vunpack.c.l.b16 %v361
        %v400 = vpack.c.b16 %v385, %v384
        %v401 = vpack.c.b16 %v387, %v386
        %v402 = vpack.c.b16 %v389, %v388
        %v403 = vpack.c.b16 %v391, %v390
        %v404 = vpack.c.b16 %v393, %v392
        %v405 = vpack.c.b16 %v395, %v394
        %v406 = vpack.c.b16 %v397, %v396
        %v407 = vpack.c.b16 %v399, %v398
        %416 = vmatprep.subr.bf16.mxu0 0
        %417 = vmatpush1.bf16.msra.mxu0 %v400
        %418 = vmatprep.subr.bf16.mxu0 0
        %419 = vmatpush1.bf16.msra.mxu0 %v401
        %420 = vmatprep.subr.bf16.mxu0 0
        %421 = vmatpush1.bf16.msra.mxu0 %v402
        %422 = vmatprep.subr.bf16.mxu0 0
        %423 = vmatpush1.bf16.msra.mxu0 %v403
        %424 = vmatprep.subr.bf16.mxu0 0
        %425 = vmatpush1.bf16.msra.mxu0 %v404
        %426 = vmatprep.subr.bf16.mxu0 0
        %427 = vmatpush1.bf16.msra.mxu0 %v405
        %428 = vmatprep.subr.bf16.mxu0 0
        %429 = vmatpush1.bf16.msra.mxu0 %v406
        %430 = vmatprep.subr.bf16.mxu0 0
        %431 = vmatpush1.bf16.msra.mxu0 %v407
        %432 = vmatprep.subr.bf16.mxu0 0
        %433 = vmatpush1.bf16.msra.mxu0 0
        %434 = vmatprep.subr.bf16.mxu0 0
        %435 = vmatpush1.bf16.msra.mxu0 0
        %436 = vmatprep.subr.bf16.mxu0 0
        %437 = vmatpush1.bf16.msra.mxu0 0
        %438 = vmatprep.subr.bf16.mxu0 0
        %439 = vmatpush1.bf16.msra.mxu0 0
        %440 = vmatprep.subr.bf16.mxu0 0
        %441 = vmatpush1.bf16.msra.mxu0 0
        %442 = vmatprep.subr.bf16.mxu0 0
        %443 = vmatpush1.bf16.msra.mxu0 0
        %444 = vmatprep.subr.bf16.mxu0 0
        %445 = vmatpush1.bf16.msra.mxu0 0
        %446 = vmatprep.subr.bf16.mxu0 0
        %447 = vmatpush1.bf16.msra.mxu0 0
        %448 = vmatprep.mubr.bf16.mxu0 0
        %449 = vmatmul.mubr.bf16.gmra.mrb[0].mxu0 %v366
        %v450 = vpop.f32.mrb[0].mxu0
        %v451 = vadd.f32 0.0, %v450
        %v452 = vpop.f32.mrb[0].mxu0
        %v453 = vpop.f32.mrb[0].mxu0
        %v454 = vadd.f32 0.0, %v453
        %v455 = vpop.f32.mrb[0].mxu0
        %456 = vdwg.mxu0
        %v457 = vadd.f32 %v342, %v451
        %v458 = vadd.f32 %v343, %v454
        %vm459 = vcmask 523264
        %460 = vst.msk [vmem:[#allocation2] sm:$0xff] %vm459, %v457
        %461 = vst.msk [vmem:[#allocation2 + $0x8] sm:$0xff] %vm459, %v458
        %p462 = scmp.eq.s32.totalorder %s29, 2
        // Predicated region
        $region65: #{tpu_custom_call.1} parent=39 // pred_check
          %p463 = pneg %p462
        $region66: #{tpu_custom_call.1} parent=39 // pred_check_branch
          %465 = sbr.rel (%p463) target = $region68
        $region67: #{tpu_custom_call.1} parent=39 // pred_region
          %v466 = vld [vmem:[#allocation2] sm:$0xff]
          %v467 = vld [vmem:[#allocation2 + $0x8] sm:$0xff]
          %v468 = vld [vmem:[#allocation8] sm:$0x1]
          %v470 = vlaneseq
          %v471 = vshrl.u32 %v470, 7
          %v472 = vsub.s32 0, %v471
          %v473 = vrot.slane %v468, %v472
          %v475 = vadd.f32 %v466, %v473
          %v476 = vadd.f32 %v467, %v473
          %v477 = vpack.c.bf16 %v476, %v475
          %v478 = vld [vmem:[#allocation9] sm:$0xff]
          %v479 = vld [vmem:[#allocation9 + $0x8] sm:$0xff]
          %v480 = vld [vmem:[#allocation9 + $0x10] sm:$0xff]
          %v481 = vld [vmem:[#allocation9 + $0x18] sm:$0xff]
          %v482 = vld [vmem:[#allocation9 + $0x20] sm:$0xff]
          %v483 = vld [vmem:[#allocation9 + $0x28] sm:$0xff]
          %v484 = vld [vmem:[#allocation9 + $0x30] sm:$0xff]
          %v485 = vld [vmem:[#allocation9 + $0x38] sm:$0xff]
          %v486 = vld [vmem:[#allocation11] sm:$0x3]
          %v488 = vlaneseq
          %v489 = vshrl.u32 %v488, 7
          %v490 = vsub.s32 0, %v489
          %v491 = vrot.slane %v486, %v490
          %v492 = vlaneseq
          %v493 = vshrl.u32 %v492, 7
          %v494 = vsub.s32 1, %v493
          %v495 = vrot.slane %v486, %v494
          %v506 = vunpack.c.l.b16 %v478
          %v507 = vunpack.c.h.b16 %v478
          %v508 = vunpack.c.l.b16 %v479
          %v509 = vunpack.c.h.b16 %v479
          %v510 = vunpack.c.l.b16 %v480
          %v511 = vunpack.c.h.b16 %v480
          %v512 = vunpack.c.l.b16 %v481
          %v513 = vunpack.c.h.b16 %v481
          %v514 = vunpack.c.l.b16 %v482
          %v515 = vunpack.c.h.b16 %v482
          %v516 = vunpack.c.l.b16 %v483
          %v517 = vunpack.c.h.b16 %v483
          %v518 = vunpack.c.l.b16 %v484
          %v519 = vunpack.c.h.b16 %v484
          %v520 = vunpack.c.l.b16 %v485
          %v521 = vunpack.c.h.b16 %v485
          %v522 = vpack.c.b16 %v508, %v506
          %v523 = vpack.c.b16 %v509, %v507
          %v524 = vpack.c.b16 %v512, %v510
          %v525 = vpack.c.b16 %v513, %v511
          %v526 = vpack.c.b16 %v516, %v514
          %v527 = vpack.c.b16 %v517, %v515
          %v528 = vpack.c.b16 %v520, %v518
          %v529 = vpack.c.b16 %v521, %v519
          %v539 = vsel %vm459, %v477, 0
          %541 = vmatprep.subr.bf16.mxu0 %v523
          %542 = vmatpush1.bf16.msra.mxu0 %v522
          %543 = vmatprep.subr.bf16.mxu0 %v525
          %544 = vmatpush1.bf16.msra.mxu0 %v524
          %545 = vmatprep.subr.bf16.mxu0 %v527
          %546 = vmatpush1.bf16.msra.mxu0 %v526
          %547 = vmatprep.subr.bf16.mxu0 %v529
          %548 = vmatpush1.bf16.msra.mxu0 %v528
          %549 = vmatprep.subr.bf16.mxu0 0
          %550 = vmatpush1.bf16.msra.mxu0 0
          %551 = vmatprep.subr.bf16.mxu0 0
          %552 = vmatpush1.bf16.msra.mxu0 0
          %553 = vmatprep.subr.bf16.mxu0 0
          %554 = vmatpush1.bf16.msra.mxu0 0
          %555 = vmatprep.subr.bf16.mxu0 0
          %556 = vmatpush1.bf16.msra.mxu0 0
          %557 = vmatprep.subr.bf16.mxu0 0
          %558 = vmatpush1.bf16.msra.mxu0 0
          %559 = vmatprep.subr.bf16.mxu0 0
          %560 = vmatpush1.bf16.msra.mxu0 0
          %561 = vmatprep.subr.bf16.mxu0 0
          %562 = vmatpush1.bf16.msra.mxu0 0
          %563 = vmatprep.subr.bf16.mxu0 0
          %564 = vmatpush1.bf16.msra.mxu0 0
          %565 = vmatprep.subr.bf16.mxu0 0
          %566 = vmatpush1.bf16.msra.mxu0 0
          %567 = vmatprep.subr.bf16.mxu0 0
          %568 = vmatpush1.bf16.msra.mxu0 0
          %569 = vmatprep.subr.bf16.mxu0 0
          %570 = vmatpush1.bf16.msra.mxu0 0
          %571 = vmatprep.subr.bf16.mxu0 0
          %572 = vmatpush1.bf16.msra.mxu0 0
          %573 = vmatprep.mubr.bf16.mxu0 0
          %574 = vmatmul.mubr.bf16.gmra.mrb[0].mxu0 %v539
          %v575 = vpop.f32.mrb[0].mxu0
          %v576 = vadd.f32 %v491, %v575
          %v577 = vpop.f32.mrb[0].mxu0
          %v578 = vadd.f32 %v495, %v577
          %v579 = vpop.f32.mrb[0].mxu0
          %v580 = vadd.f32 %v491, %v579
          %v581 = vpop.f32.mrb[0].mxu0
          %v582 = vadd.f32 %v495, %v581
          %583 = vdwg.mxu0
          %v584 = vpack.c.bf16 %v580, %v576
          %v585 = vpack.c.bf16 %v582, %v578
          %v588 = vunpack.c.l.b16 %v584
          %v589 = vunpack.c.l.b16 %v585
          %v590 = vunpack.c.h.b16 %v584
          %v591 = vunpack.c.h.b16 %v585
          %v592 = vpack.c.b16 %v589, %v588
          %v593 = vpack.c.b16 %v591, %v590
          %vm596 = vcmask 1043456
          %vm597 = vcmask 523268
          %vm598 = vmor %vm597, %vm596
          %599 = vst.msk [vmem:[#allocation12] sm:$0xff] %vm598, %v592
          %600 = vst.msk [vmem:[#allocation12 + $0x8] sm:$0xff] %vm598, %v593
        $region68: #{tpu_custom_call.1} parent=39 // pred_fallthru
          _
        // Predicated region
        $region69: #{tpu_custom_call.1} parent=39 // pred_check
          %p601 = pneg %p171
        $region70: #{tpu_custom_call.1} parent=39 // pred_check_branch
          %603 = sbr.rel (%p601) target = $region72
        $region71: #{tpu_custom_call.1} parent=39 // pred_region
          %s604 = smul.u32 2, %s28
          %s606 = ssub.s32 256, 256
          %607 = vsyncadd [#allocation5], %s606
          %s608 = smul.addr %s604, 2
          %s609 = smul.addr %s608, 64
          %s610 = scalar_lea.hbm %s5, %s609
          %s611 = sshll.u32 [#allocation12], 4
          %s612 = int_to_ptr.vmem [resolvable:$true] %s611
          %617 = dma.vmem_to_hbm [thread:$0]  %s612, 256, %s610, [#allocation5], 128, 128, 8
        $region72: #{tpu_custom_call.1} parent=39 // pred_fallthru
          _
        // Predicated region
        $region73: #{tpu_custom_call.1} parent=39 // pred_check
          %p618 = pneg %p171
        $region74: #{tpu_custom_call.1} parent=39 // pred_check_branch
          %620 = sbr.rel (%p618) target = $region76
        $region75: #{tpu_custom_call.1} parent=39 // pred_region
          %621 = dma.done [#allocation5], 256
        $region76: #{tpu_custom_call.1} parent=39 // pred_fallthru
          _
      $region40: #{tpu_custom_call.1} parent=5 // pred_fallthru
        _
      %p622 = scmp.le.s32.totalorder 2, %s19
      // Predicated region
      $region77: #{tpu_custom_call.1} parent=5 // pred_check
        %p623 = pneg %p622
      $region78: #{tpu_custom_call.1} parent=5 // pred_check_branch
        %625 = sbr.rel (%p623) target = $region80
      $region79: #{tpu_custom_call.1} parent=5 // pred_region
        %s626 = ssub.s32 %s19, 2
      $region80: #{tpu_custom_call.1} parent=5 // pred_fallthru
        _
    $region6: #{tpu_custom_call.1} parent=1 // loop_footer
      %s23 = sadd.s32 1, %s19
    $region7: #{tpu_custom_call.1} parent=1 // loop_footer_branch
      %18 = sbr.rel target = $region3
    $region8: #{tpu_custom_call.1} parent=1 // loop_exit
      _
    %627 = vsyncpa [#allocation4], 1
    %s628 = scalar_lea.sflag [#allocation4], 1
    %629 = vsyncpa %s628, 1
    %630 = vsyncpa [#allocation7], 1
    %s631 = scalar_lea.sflag [#allocation7], 1
    %632 = vsyncpa %s631, 1
    %633 = vsyncpa [#allocation10], 1
    %634 = vsyncpa [#allocation5], 1
    %s635 = scalar_lea.sflag [#allocation5], 1
    %636 = vsyncpa %s635, 1

</llo_original>
